<compile_context>
chip_gen: v6e
topology: v6e:2x2x1
jax: 0.10.0
libtpu: 0.0.40
codegen_flags: <defaults>
</compile_context>

<pallas_src>
import functools

import jax
import jax.numpy as jnp
from jax.experimental import pallas as pl
from jax.experimental.pallas import tpu as pltpu


def _round_up(x, m):
    return ((x + m - 1) // m) * m


def _tpu_kind():
    try:
        return jax.devices()[0].device_kind.lower()
    except Exception:
        return ""


def _is_v5e(kind):
    return ("v5 lite" in kind) or ("v5e" in kind) or ("v5litepod" in kind)


def _vmem_limit_bytes(kind):
    # v5e / v6e have 128 MiB VMEM per TensorCore -> allow ~100 MiB scoped.
    if _is_v5e(kind) or ("v6" in kind) or ("trillium" in kind):
        return 100 * 1024 * 1024
    # v7x has 64 MiB per TensorCore; unknown chips: stay conservative.
    return 44 * 1024 * 1024


# ---------------------------------------------------------------------------
# Kernels
# ---------------------------------------------------------------------------

def _conv3x3_bn_relu_kernel(x_ref, w_ref, b_ref, o_ref):
    """Direct conv path: 9 accumulating MXU matmuls with K = padded C_in.

    x_ref: (1, TH+2, W+2, C_in_p)  halo'd input rows (compute dtype)
    w_ref: (9, C_in_p, TCo)        BN-scale-folded taps (compute dtype)
    b_ref: (1, TCo)                folded BN bias (f32)
    o_ref: (1, TH, W, Co_blk)      output tile, Co_blk <= TCo
    """
    TH, W, Co_blk = o_ref.shape[1], o_ref.shape[2], o_ref.shape[3]
    Cin = x_ref.shape[3]
    TCo = w_ref.shape[2]

    xt = x_ref[0]                                     # (TH+2, W+2, Cin)
    acc = None
    for kh in range(3):                               # static unroll: 9 MXU calls
        for kw in range(3):
            lhs = xt[kh:kh + TH, kw:kw + W, :].reshape(TH * W, Cin)
            c = jnp.dot(lhs, w_ref[kh * 3 + kw],
                        preferred_element_type=jnp.float32)
            acc = c if acc is None else acc + c       # local f32 accumulation

    y = jnp.maximum(acc + b_ref[...], 0.0)            # f32 epilogue (v5e-safe)
    y = y.reshape(TH, W, TCo)
    o_ref[0] = y[:, :, :Co_blk].astype(o_ref.dtype)   # single output store


def _im2col_bn_relu_kernel(x_ref, w_ref, b_ref, o_ref):
    """Small-C_in path: one MXU matmul over jointly-padded 9*C_in taps.

    x_ref: (1, TM, K_p)    im2col patches (compute dtype)
    w_ref: (K_p, C_out_p)  folded weights (compute dtype)
    b_ref: (1, C_out_p)    folded BN bias (f32)
    o_ref: (1, TM, C_out)  unpadded output tile
    """
    y = jnp.dot(x_ref[0], w_ref[...], preferred_element_type=jnp.float32)
    y = jnp.maximum(y + b_ref[...], 0.0)
    o_ref[0] = y[:, :o_ref.shape[2]].astype(o_ref.dtype)


# ---------------------------------------------------------------------------
# Wrapper
# ---------------------------------------------------------------------------

@functools.partial(jax.jit, static_argnames=("eps", "compute_dtype"))
def conv_bn_relu(x_nchw, weight_oihw, gamma, beta, running_mean, running_var,
                 eps=1e-5, compute_dtype=jnp.float32):
    """Matches PyTorch ConvBnReLU.forward (eval-mode BN). NCHW in / NCHW out.

    compute_dtype=jnp.bfloat16 opts into bf16 MXU operands (f32 accumulation).
    """
    N, C_in, H, W = x_nchw.shape
    C_out = weight_oihw.shape[0]
    out_dtype = x_nchw.dtype
    cbytes = jnp.dtype(compute_dtype).itemsize
    obytes = jnp.dtype(out_dtype).itemsize
    LANE = 128

    kind = _tpu_kind()
    vmem_limit = _vmem_limit_bytes(kind)
    ws_budget = int(0.6 * vmem_limit)     # headroom for compiler temporaries

    # Fold BatchNorm (eval) into per-out-channel scale/bias; fold scale into weights.
    inv_std = jax.lax.rsqrt(running_var.astype(jnp.float32) + eps)
    scale = gamma.astype(jnp.float32) * inv_std                          # (C_out,)
    bias = beta.astype(jnp.float32) - running_mean.astype(jnp.float32) * scale
    w_hwio = jnp.transpose(weight_oihw.astype(jnp.float32), (2, 3, 1, 0)) * scale

    # TODO(synk): NCHW<->NHWC transposes stay in the wrapper to keep the PyTorch
    #             interface; drop them if the surrounding model is NHWC end-to-end.
    x_nhwc = jnp.transpose(x_nchw, (0, 2, 3, 1)).astype(compute_dtype)

    # Actual (unpadded) work for the XLA scheduler.
    cost = pl.CostEstimate(
        flops=2 * N * H * W * 9 * C_in * C_out,
        transcendentals=0,
        bytes_accessed=(N * H * W * C_in * cbytes + 9 * C_in * C_out * cbytes
                        + C_out * 4 + N * H * W * C_out * obytes),
    )

    if 9 * C_in <= LANE:
        # ---------------- small-C_in path: im2col + single matmul ----------------
        # Padding C_in alone to 128 would make >95% of the contraction zeros; pad
        # the joint 9*C_in instead and issue one K=128 matmul per tile.
        K = 9 * C_in
        K_p = LANE
        C_out_p = _round_up(C_out, LANE)

        x_sp = jnp.pad(x_nhwc, ((0, 0), (1, 1), (1, 1), (0, 0)))
        patches = jnp.concatenate(
            [x_sp[:, kh:kh + H, kw:kw + W, :] for kh in range(3) for kw in range(3)],
            axis=-1)                                            # (N, H, W, 9*C_in)
        patches = jnp.pad(patches, ((0, 0), (0, 0), (0, 0), (0, K_p - K)))
        patches = patches.reshape(N, H * W, K_p)

        w_k = jnp.pad(w_hwio.reshape(K, C_out),
                      ((0, K_p - K), (0, C_out_p - C_out))).astype(compute_dtype)
        bias_p = jnp.pad(bias, (0, C_out_p - C_out)).reshape(1, C_out_p)

        M = H * W

        def ws_b(tm):   # per-step working set (double-buffered)
            return 2 * (tm * K_p * cbytes + K_p * C_out_p * cbytes
                        + tm * C_out * obytes + tm * C_out_p * 4)

        divs = [d for d in range(1, M + 1) if M % d == 0 and (d % 8 == 0 or d == M)]
        fitting = [d for d in divs if ws_b(d) <= ws_budget]
        TM = max(fitting) if fitting else min(divs)
        nM = M // TM

        out = pl.pallas_call(
            _im2col_bn_relu_kernel,
            out_shape=jax.ShapeDtypeStruct((N, M, C_out), out_dtype),
            grid_spec=pltpu.PrefetchScalarGridSpec(
                num_scalar_prefetch=0,
                grid=(nM, N),
                in_specs=[
                    pl.BlockSpec((1, TM, K_p), lambda m, n: (n, m, 0)),
                    pl.BlockSpec((K_p, C_out_p), lambda m, n: (0, 0)),
                    pl.BlockSpec((1, C_out_p), lambda m, n: (0, 0)),
                ],
                out_specs=pl.BlockSpec((1, TM, C_out), lambda m, n: (n, m, 0)),
            ),
            compiler_params=pltpu.CompilerParams(
                dimension_semantics=("parallel", "parallel"),
                vmem_limit_bytes=vmem_limit,
            ),
            cost_estimate=cost,
        )(patches, w_k, bias_p)
        out_nhwc = out.reshape(N, H, W, C_out)

    else:
        # ---------------- general path: 9-matmul direct convolution ----------------
        C_in_p = _round_up(C_in, LANE)
        C_out_p = _round_up(C_out, LANE)

        # C_out tiling: full folded weight resident when small (single DMA, no Cout
        # grid axis); otherwise 256-wide tiles fill the v6e/v7x MXU (128-wide on v5e).
        w_bytes_full = 9 * C_in_p * C_out_p * cbytes
        if w_bytes_full <= 4 * 1024 * 1024:
            TCo = C_out_p
        elif C_out_p % 256 == 0 and not _is_v5e(kind):
            TCo = 256
        else:
            TCo = 128
        nCo = C_out_p // TCo
        if nCo == 1:
            C_out_arr, Co_blk = C_out, C_out          # unpadded HBM output
        elif C_out % TCo == 0:
            C_out_arr, Co_blk = C_out, TCo            # lane-dense tiled output
        else:
            C_out_arr, Co_blk = C_out_p, TCo          # rare: pad + slice after

        w_k = jnp.pad(w_hwio, ((0, 0), (0, 0), (0, C_in_p - C_in),
                               (0, C_out_p - C_out)))
        w_k = w_k.reshape(9, C_in_p, C_out_p).astype(compute_dtype)
        bias_p = jnp.pad(bias, (0, C_out_p - C_out)).reshape(1, C_out_p)

        x_pad = jnp.pad(x_nhwc, ((0, 0), (1, 1), (1, 1), (0, C_in_p - C_in)))

        # Budget-driven H tiling: input halo + weight + output + f32 acc + lhs temp,
        # each double-buffered.  For typical feature maps this gives nH == 1, and the
        # MXU M dimension (TH*W) is large (>=512 rows whenever the image allows it).
        def ws_a(th):
            in_t = (th + 2) * (W + 2) * C_in_p * cbytes
            w_t = 9 * C_in_p * TCo * cbytes
            out_t = th * W * Co_blk * obytes
            acc_t = th * W * TCo * 4
            lhs_t = th * W * C_in_p * cbytes
            return 2 * (in_t + w_t + out_t + acc_t + lhs_t)

        divs = [d for d in range(1, H + 1) if H % d == 0]
        fitting = [d for d in divs if ws_a(d) <= ws_budget]
        TH = max(fitting) if fitting else 1
        nH = H // TH

        if nH == 1:
            x_in = x_pad                               # (N, H+2, W+2, C_in_p), no copy
            x_index = lambda h, n, c: (n, 0, 0, 0)
        else:
            # TODO(synk): for very large feature maps, replace this wrapper-side halo
            #             materialization with in-kernel halo DMA (memory_space=pl.ANY
            #             + pltpu.make_async_copy double-buffering).  With the large
            #             budget-driven TH the duplication here is only ~2/TH.
            x_in = jnp.stack(
                [x_pad[:, h * TH:h * TH + TH + 2] for h in range(nH)], axis=1
            ).reshape(N * nH, TH + 2, W + 2, C_in_p)
            x_index = lambda h, n, c: (n * nH + h, 0, 0, 0)

        out = pl.pallas_call(
            _conv3x3_bn_relu_kernel,
            out_shape=jax.ShapeDtypeStruct((N, H, W, C_out_arr), out_dtype),
            grid_spec=pltpu.PrefetchScalarGridSpec(
                num_scalar_prefetch=0,
                grid=(nH, N, nCo),                     # largest parallel axis leads
                in_specs=[
                    pl.BlockSpec((1, TH + 2, W + 2, C_in_p), x_index),
                    pl.BlockSpec((9, C_in_p, TCo), lambda h, n, c: (0, 0, c)),
                    pl.BlockSpec((1, TCo), lambda h, n, c: (0, c)),
                ],
                out_specs=pl.BlockSpec((1, TH, W, Co_blk),
                                       lambda h, n, c: (n, h, 0, c)),
            ),
            compiler_params=pltpu.CompilerParams(
                dimension_semantics=("parallel", "parallel", "parallel"),
                vmem_limit_bytes=vmem_limit,
            ),
            cost_estimate=cost,
        )(x_in, w_k, bias_p)
        out_nhwc = out[..., :C_out]                    # no-op when C_out_arr == C_out

    return jnp.transpose(out_nhwc, (0, 3, 1, 2))       # NHWC -> NCHW


# ---------------------------------------------------------------------------
# References
# ---------------------------------------------------------------------------

def _reference_f32(x, w, gamma, beta, mean, var, eps=1e-5):
    y = jax.lax.conv_general_dilated(
        x.astype(jnp.float32), w.astype(jnp.float32),
        window_strides=(1, 1), padding=((1, 1), (1, 1)),
        dimension_numbers=("NCHW", "OIHW", "NCHW"))
    inv_std = jax.lax.rsqrt(var.astype(jnp.float32) + eps)
    s = (gamma * inv_std).reshape(1, -1, 1, 1)
    b = (beta - mean * gamma * inv_std).reshape(1, -1, 1, 1)
    return jnp.maximum(y * s + b, 0.0)


def _reference_quantized(x, w, gamma, beta, mean, var, eps=1e-5,
                         compute_dtype=jnp.bfloat16):
    # Same operand quantization as the kernel (scale folded into weights, bf16
    # operands, f32 accumulation) — isolates accumulation-order differences only.
    inv_std = jax.lax.rsqrt(var.astype(jnp.float32) + eps)
    scale = gamma.astype(jnp.float32) * inv_std
    bias = beta.astype(jnp.float32) - mean.astype(jnp.float32) * scale
    wq = (w.astype(jnp.float32) * scale[:, None, None, None]).astype(compute_dtype)
    xq = x.astype(compute_dtype)
    y = jax.lax.conv_general_dilated(
        xq, wq, window_strides=(1, 1), padding=((1, 1), (1, 1)),
        dimension_numbers=("NCHW", "OIHW", "NCHW"),
        preferred_element_type=jnp.float32)
    return jnp.maximum(y + bias.reshape(1, -1, 1, 1), 0.0)


# ---------------------------------------------------------------------------
# Self-test
# ---------------------------------------------------------------------------

if __name__ == "__main__":
    keys = jax.random.split(jax.random.PRNGKey(0), 12)

    def make_case(ks, n, ci, co, h, w, wscale):
        x = jax.random.normal(ks[0], (n, ci, h, w), dtype=jnp.float32)
        wt = wscale * jax.random.normal(ks[1], (co, ci, 3, 3), dtype=jnp.float32)
        g = 1.0 + 0.1 * jax.random.normal(ks[2], (co,), dtype=jnp.float32)
        b = 0.1 * jax.random.normal(ks[3], (co,), dtype=jnp.float32)
        m = 0.1 * jax.random.normal(ks[4], (co,), dtype=jnp.float32)
        v = jnp.abs(1.0 + 0.1 * jax.random.normal(ks[5], (co,), dtype=jnp.float32))
        return x, wt, g, b, m, v

    def check(x, wt, g, b, m, v):
        n, _, h, w = x.shape
        co = wt.shape[0]
        ref = _reference_f32(x, wt, g, b, m, v)

        out_f32 = jax.block_until_ready(conv_bn_relu(x, wt, g, b, m, v))
        assert out_f32.shape == (n, co, h, w)
        assert jnp.max(jnp.abs(out_f32 - ref)) < 1e-3, "f32 path mismatch"

        out_bf16 = jax.block_until_ready(
            conv_bn_relu(x, wt, g, b, m, v, compute_dtype=jnp.bfloat16))
        ref_q = _reference_quantized(x, wt, g, b, m, v)
        assert jnp.max(jnp.abs(out_bf16 - ref_q)) < 2e-3, "bf16 path vs quantized ref"
        assert jnp.max(jnp.abs(out_bf16 - ref)) < 1e-1, "bf16 path vs f32 ref"

    # Case 1: small C_in (first-layer style) -> im2col single-matmul kernel.
    check(*make_case(keys[0:6], 2, 4, 8, 16, 16, 0.1))

    # Case 2: larger C_in -> 9-matmul direct-conv kernel.
    check(*make_case(keys[6:12], 1, 32, 16, 16, 16, 0.05))

    print("KERNEL_OK")
</pallas_src>

<mosaic_0001>
module attributes {stable_mosaic.version = 11 : i64} {
  func.func @_im2col_bn_relu_kernel(%arg0: i32, %arg1: i32, %arg2: memref<1x256x128xf32, #tpu.memory_space<vmem>>, %arg3: memref<128x128xf32, #tpu.memory_space<vmem>>, %arg4: memref<1x128xf32, #tpu.memory_space<vmem>>, %arg5: memref<1x256x8xf32, #tpu.memory_space<vmem>>) attributes {dimension_semantics = [#tpu.dimension_semantics<parallel>, #tpu.dimension_semantics<parallel>], iteration_bounds = array<i64: 1, 2>, scalar_prefetch = 0 : i64, scratch_operands = 0 : i64, tpu.core_type = #tpu.core_type<tc>, window_params = [{transform_indices = @transform_0, window_bounds = array<i64: 1, 256, 128>}, {pipeline_mode = #tpu.pipeline_mode<synchronous>, transform_indices = @transform_1, window_bounds = array<i64: 128, 128>}, {pipeline_mode = #tpu.pipeline_mode<synchronous>, transform_indices = @transform_2, window_bounds = array<i64: 1, 128>}, {transform_indices = @transform_3, window_bounds = array<i64: 1, 256, 8>}]} {
    %c0 = arith.constant 0 : index
    %c0_0 = arith.constant 0 : index
    %c0_1 = arith.constant 0 : index
    %0 = vector.load %arg2[%c0, %c0_0, %c0_1] : memref<1x256x128xf32, #tpu.memory_space<vmem>>, vector<1x256x128xf32>
    %1 = vector.shape_cast %0 : vector<1x256x128xf32> to vector<256x128xf32>
    %c0_2 = arith.constant 0 : index
    %c0_3 = arith.constant 0 : index
    %2 = vector.load %arg3[%c0_2, %c0_3] : memref<128x128xf32, #tpu.memory_space<vmem>>, vector<128x128xf32>
    %cst = arith.constant dense<0.000000e+00> : vector<256x128xf32>
    %3 = tpu.matmul %1, %2, %cst {dimension_numbers = #tpu.dot_dimension_numbers<[1], [0], [0], [1], [0, 0, 1, 1], [], []>} : vector<256x128xf32>, vector<128x128xf32>, vector<256x128xf32> -> vector<256x128xf32>
    %c0_4 = arith.constant 0 : index
    %c0_5 = arith.constant 0 : index
    %4 = vector.load %arg4[%c0_4, %c0_5] : memref<1x128xf32, #tpu.memory_space<vmem>>, vector<1x128xf32>
    %5 = vector.broadcast %4 : vector<1x128xf32> to vector<256x128xf32>
    %6 = arith.addf %3, %5 : vector<256x128xf32>
    %cst_6 = arith.constant 0.000000e+00 : f32
    %7 = vector.broadcast %cst_6 : f32 to vector<256x128xf32>
    %8 = arith.maximumf %6, %7 : vector<256x128xf32>
    %9 = vector.extract_strided_slice %8 {offsets = [0, 0], sizes = [256, 8], strides = [1, 1]} : vector<256x128xf32> to vector<256x8xf32>
    %c0_7 = arith.constant 0 : index
    %c0_8 = arith.constant 0 : index
    %c0_9 = arith.constant 0 : index
    %10 = vector.load %arg5[%c0_7, %c0_8, %c0_9] : memref<1x256x8xf32, #tpu.memory_space<vmem>>, vector<1x256x8xf32>
    %11 = vector.shape_cast %10 : vector<1x256x8xf32> to vector<256x8xf32>
    %12 = vector.shape_cast %9 : vector<256x8xf32> to vector<1x256x8xf32>
    tpu.vector_store %arg5[%c0_7, %c0_8, %c0_9], %12 {strides = array<i32>} : memref<1x256x8xf32, #tpu.memory_space<vmem>>, vector<1x256x8xf32>,
    return
  }
  func.func @transform_0(%arg0: i32, %arg1: i32) -> (i32, i32, i32) {
    %c0_i32 = arith.constant 0 : i32
    %c0_i32_0 = arith.constant 0 : i32
    return %arg1, %arg0, %c0_i32 : i32, i32, i32
  }
  func.func @transform_1(%arg0: i32, %arg1: i32) -> (i32, i32) {
    %c0_i32 = arith.constant 0 : i32
    %c0_i32_0 = arith.constant 0 : i32
    %c0_i32_1 = arith.constant 0 : i32
    return %c0_i32, %c0_i32_0 : i32, i32
  }
  func.func @transform_2(%arg0: i32, %arg1: i32) -> (i32, i32) {
    %c0_i32 = arith.constant 0 : i32
    %c0_i32_0 = arith.constant 0 : i32
    %c0_i32_1 = arith.constant 0 : i32
    return %c0_i32, %c0_i32_0 : i32, i32
  }
  func.func @transform_3(%arg0: i32, %arg1: i32) -> (i32, i32, i32) {
    %c0_i32 = arith.constant 0 : i32
    %c0_i32_0 = arith.constant 0 : i32
    return %arg1, %arg0, %c0_i32 : i32, i32, i32
  }
}

</mosaic_0001>

<llo_original>
// kernel: conv_bn_relu.1
$region0: #{conv_bn_relu.1}
  #allocation0 [shape = 'u32[]', space=smem, size = 0x4, offset = 0x4, fixed_abs, tag = 'smem constant byte address 0x4 - core index']
  #allocation1 [shape = 'u32[144,128]{1,0:T(1,128)}', space=vmem, size = 0x12000, scoped, tag = 'internal scratch']
  %s0 = inlined_call_operand.vmem [shape: f32[2,256,128], index: 0, kind: input, shape index: {}]
  %s1 = inlined_call_operand.vmem [shape: f32[128,128], index: 1, kind: input, shape index: {}]
  %s2 = inlined_call_operand.vmem [shape: f32[1,128], index: 2, kind: input, shape index: {}]
  %s3 = inlined_call_operand.vmem [shape: f32[2,256,8], index: 3, kind: output, shape index: {}]
  %s4 = sld [smem:[#allocation0]]
  $region45: #{conv_bn_relu.1} parent=0
    _
  %s6 = ssub.s32 1, %s4
  %s7 = scalar_select 0, %s6, %s4
  loop: start=0, step=1, limit=4
  $region2: #{conv_bn_relu.1} parent=0 // loop_pre_header
    _
  $region3: #{conv_bn_relu.1} parent=0 // loop_header
    %s9 = sphi 0, %s13
    %p10 = scmp.ge.s32.totalorder %s9, 4
    %s16 = sphi 0, %s28
    %s17 = sphi 0, %s24
    %s18 = sphi 0, %s16
    %s19 = sphi 0, %s17
    %s20 = sphi 0, %s18
    %s21 = sphi 0, %s19
    %s33 = sphi 0, %s35
    %s36 = sphi 0, %s33
    %s37 = sphi 0, %s36
    %s53 = sphi 0, %s37
    %s57 = sphi 0, %s57
    %s59 = sphi 0, %s57
    %s60 = sphi 0, %s59
    %s74 = sphi 0, %s60
    %s78 = sphi 0, %s78
    %s80 = sphi 0, %s78
    %s81 = sphi 0, %s80
    %s95 = sphi 0, %s81
    %s103 = sphi 0, %s105
    %s106 = sphi 0, %s103
    %s107 = sphi 0, %s106
    %s123 = sphi 0, %s107
  $region4: #{conv_bn_relu.1} parent=0 // loop_header_branch
    %12 = sbr.rel (%p10) target = $region8
  $region5: #{conv_bn_relu.1} parent=0 // loop_body
    %s14 = ssub.s32 %s9, 1
    %s15 = ssub.s32 %s9, 2
    %s22 = sadd.s32 1, %s17
    %p23 = scmp.ge.s32.totalorder %s22, 2
    %s24 = scalar_select %p23, 0, %s22
    %s25 = sadd.s32 1, %s16
    %s26 = scalar_select %p23, %s25, %s16
    %p27 = scmp.ge.s32.totalorder %s26, 1
    %s28 = scalar_select %p27, 0, %s26
    %s29 = ssub.s32 %s17, %s24
    %s30 = ssub.s32 %s16, %s28
    %s31 = sor.u32 %s29, %s30
    %p32 = scmp.eq.s32.totalorder %s31, 0
    %s34 = sadd.s32 %s33, 1
    %s35 = scalar_select %p32, %s33, %s34
    %p38 = pneg %p32
    %p39 = scmp.eq.s32.totalorder %s9, 1
    %p40 = por %p38, %p39
    %p41 = scmp.ne.s32.totalorder %s33, %s36
    %p42 = scmp.eq.s32.totalorder %s9, 0
    %p43 = por %p41, %p42
    %p44 = scmp.ne.s32.totalorder %s33, %s36
    %p45 = scmp.eq.s32.totalorder %s14, 1
    %p46 = por %p44, %p45
    %p47 = scmp.ne.s32.totalorder %s36, %s37
    %p48 = scmp.eq.s32.totalorder %s14, 0
    %p49 = por %p47, %p48
    %p50 = scmp.ne.s32.totalorder %s36, %s37
    %p51 = scmp.eq.s32.totalorder %s15, 1
    %p52 = por %p50, %p51
    %p54 = scmp.ne.s32.totalorder %s37, %s53
    %p55 = scmp.eq.s32.totalorder %s15, 0
    %p56 = por %p54, %p55
    %s58 = sadd.s32 %s57, 1
    %p61 = scmp.eq.s32.totalorder %s9, 1
    %p62 = scmp.ne.s32.totalorder %s57, %s59
    %p63 = scmp.eq.s32.totalorder %s9, 0
    %p64 = por %p62, %p63
    %p65 = scmp.ne.s32.totalorder %s57, %s59
    %p66 = scmp.eq.s32.totalorder %s14, 1
    %p67 = por %p65, %p66
    %p68 = scmp.ne.s32.totalorder %s59, %s60
    %p69 = scmp.eq.s32.totalorder %s14, 0
    %p70 = por %p68, %p69
    %p71 = scmp.ne.s32.totalorder %s59, %s60
    %p72 = scmp.eq.s32.totalorder %s15, 1
    %p73 = por %p71, %p72
    %p75 = scmp.ne.s32.totalorder %s60, %s74
    %p76 = scmp.eq.s32.totalorder %s15, 0
    %p77 = por %p75, %p76
    %s79 = sadd.s32 %s78, 1
    %p82 = scmp.eq.s32.totalorder %s9, 1
    %p83 = scmp.ne.s32.totalorder %s78, %s80
    %p84 = scmp.eq.s32.totalorder %s9, 0
    %p85 = por %p83, %p84
    %p86 = scmp.ne.s32.totalorder %s78, %s80
    %p87 = scmp.eq.s32.totalorder %s14, 1
    %p88 = por %p86, %p87
    %p89 = scmp.ne.s32.totalorder %s80, %s81
    %p90 = scmp.eq.s32.totalorder %s14, 0
    %p91 = por %p89, %p90
    %p92 = scmp.ne.s32.totalorder %s80, %s81
    %p93 = scmp.eq.s32.totalorder %s15, 1
    %p94 = por %p92, %p93
    %p96 = scmp.ne.s32.totalorder %s81, %s95
    %p97 = scmp.eq.s32.totalorder %s15, 0
    %p98 = por %p96, %p97
    %s99 = ssub.s32 %s17, %s24
    %s100 = ssub.s32 %s16, %s28
    %s101 = sor.u32 %s99, %s100
    %p102 = scmp.eq.s32.totalorder %s101, 0
    %s104 = sadd.s32 %s103, 1
    %s105 = scalar_select %p102, %s103, %s104
    %p108 = pneg %p102
    %p109 = scmp.eq.s32.totalorder %s9, 1
    %p110 = por %p108, %p109
    %p111 = scmp.ne.s32.totalorder %s103, %s106
    %p112 = scmp.eq.s32.totalorder %s9, 0
    %p113 = por %p111, %p112
    %p114 = scmp.ne.s32.totalorder %s103, %s106
    %p115 = scmp.eq.s32.totalorder %s14, 1
    %p116 = por %p114, %p115
    %p117 = scmp.ne.s32.totalorder %s106, %s107
    %p118 = scmp.eq.s32.totalorder %s14, 0
    %p119 = por %p117, %p118
    %p120 = scmp.ne.s32.totalorder %s106, %s107
    %p121 = scmp.eq.s32.totalorder %s15, 1
    %p122 = por %p120, %p121
    %p124 = scmp.ne.s32.totalorder %s107, %s123
    %p125 = scmp.eq.s32.totalorder %s15, 0
    %p126 = por %p124, %p125
    %p127 = scmp.le.s32.totalorder 1, %s9
    %p128 = scmp.lt.s32.totalorder %s9, 3
    %p129 = pnand %p127, %p128
    %p130 = pneg %p129
    // Predicated region
    $region9: #{conv_bn_relu.1} parent=5 // pred_check
      _
    $region10: #{conv_bn_relu.1} parent=5 // pred_check_branch
      %132 = sbr.rel (%p129) target = $region12
    $region11: #{conv_bn_relu.1} parent=5 // pred_region
      %s133 = ssub.s32 %s9, 1
      // Predicated region
      $region13: #{conv_bn_relu.1} parent=11 // pred_check
        %p134 = pneg %p70
      $region14: #{conv_bn_relu.1} parent=11 // pred_check_branch
        %136 = sbr.rel (%p134) target = $region16
      $region15: #{conv_bn_relu.1} parent=11 // pred_region
        _
      $region16: #{conv_bn_relu.1} parent=11 // pred_fallthru
        _
      // Predicated region
      $region17: #{conv_bn_relu.1} parent=11 // pred_check
        %p137 = pneg %p91
      $region18: #{conv_bn_relu.1} parent=11 // pred_check_branch
        %139 = sbr.rel (%p137) target = $region20
      $region19: #{conv_bn_relu.1} parent=11 // pred_region
        _
      $region20: #{conv_bn_relu.1} parent=11 // pred_fallthru
        _
    $region12: #{conv_bn_relu.1} parent=5 // pred_fallthru
      _
    %p140 = scmp.lt.s32.totalorder %s9, 2
    // Predicated region
    $region21: #{conv_bn_relu.1} parent=5 // pred_check
      %p141 = pneg %p140
    $region22: #{conv_bn_relu.1} parent=5 // pred_check_branch
      %143 = sbr.rel (%p141) target = $region24
    $region23: #{conv_bn_relu.1} parent=5 // pred_region
      // Predicated region
      $region25: #{conv_bn_relu.1} parent=23 // pred_check
        %p144 = pneg %p43
      $region26: #{conv_bn_relu.1} parent=23 // pred_check_branch
        %146 = sbr.rel (%p144) target = $region28
      $region27: #{conv_bn_relu.1} parent=23 // pred_region
        %s147 = smul.u32 32, %s16
        %p148 = scmp.lt.s32.totalorder %s17, 1
        %s149 = scalar_select %p148, %s17, 1
        %p150 = scmp.lt.s32.totalorder %s147, 31
        %s151 = scalar_select %p150, %s147, 31
        %s152 = smul.addr %s149, 32
        %s153 = sadd.s32 %s151, %s152
        %s154 = smul.addr %s153, 8
        %s155 = scalar_lea.vmem %s0, %s154
        %s156 = smul.u32 32, %s16
      $region28: #{conv_bn_relu.1} parent=23 // pred_fallthru
        _
    $region24: #{conv_bn_relu.1} parent=5 // pred_fallthru
      _
    %p157 = scmp.le.s32.totalorder 1, %s9
    %p158 = scmp.lt.s32.totalorder %s9, 3
    %p159 = pnand %p157, %p158
    %p160 = pneg %p159
    // Predicated region
    $region29: #{conv_bn_relu.1} parent=5 // pred_check
      _
    $region30: #{conv_bn_relu.1} parent=5 // pred_check_branch
      %162 = sbr.rel (%p159) target = $region32
    $region31: #{conv_bn_relu.1} parent=5 // pred_region
      %s163 = ssub.s32 %s9, 1
      %s164 = smul.u32 32, %s18
      %p165 = scmp.lt.s32.totalorder %s19, 1
      %s166 = scalar_select %p165, %s19, 1
      %p167 = scmp.lt.s32.totalorder %s164, 31
      %s168 = scalar_select %p167, %s164, 31
      %s169 = smul.addr %s166, 32
      %s170 = sadd.s32 %s168, %s169
      %s171 = smul.addr %s170, 8
      %s172 = scalar_lea.vmem %s0, %s171
      %p173 = pneg %p49
      %p174 = pneg %p46
      %p175 = pneg %p70
      %p176 = pneg %p67
      %p177 = pneg %p91
      %p178 = pneg %p88
      %p179 = pneg %p119
      %p180 = pneg %p116
      %s181 = smul.u32 32, %s18
      %p182 = scmp.lt.s32.totalorder %s19, 1
      %s183 = scalar_select %p182, %s19, 1
      %p184 = scmp.lt.s32.totalorder %s181, 31
      %s185 = scalar_select %p184, %s181, 31
      %s186 = smul.addr %s183, 32
      %s187 = sadd.s32 %s185, %s186
      %s188 = smul.addr %s187, 8
      %s189 = scalar_lea.vmem %s3, %s188
      %s190 = smul.u32 32, %s18
      %p191 = scmp.lt.s32.totalorder %s19, 1
      %s192 = scalar_select %p191, %s19, 1
      %p193 = scmp.lt.s32.totalorder %s190, 31
      %s194 = scalar_select %p193, %s190, 31
      %s195 = smul.addr %s192, 32
      %s196 = sadd.s32 %s194, %s195
      %s197 = smul.addr %s196, 8
      %s198 = scalar_lea.vmem %s0, %s197
      %s199 = smul.u32 32, %s18
      %s200 = smul.u32 32, %s18
      %p201 = scmp.lt.s32.totalorder %s19, 1
      %s202 = scalar_select %p201, %s19, 1
      %p203 = scmp.lt.s32.totalorder %s200, 31
      %s204 = scalar_select %p203, %s200, 31
      %s205 = smul.addr %s202, 32
      %s206 = sadd.s32 %s204, %s205
      %s207 = smul.addr %s206, 8
      %s208 = scalar_lea.vmem %s3, %s207
      %s209 = smul.u32 32, %s18
      %v210 = vld [vmem:[%s198] sm:$0xff]
      %v211 = vld [vmem:[%s198 + $0x8] sm:$0xff]
      %v212 = vld [vmem:[%s198 + $0x10] sm:$0xff]
      %v213 = vld [vmem:[%s198 + $0x18] sm:$0xff]
      %v214 = vld [vmem:[%s198 + $0x20] sm:$0xff]
      %v215 = vld [vmem:[%s198 + $0x28] sm:$0xff]
      %v216 = vld [vmem:[%s198 + $0x30] sm:$0xff]
      %v217 = vld [vmem:[%s198 + $0x38] sm:$0xff]
      %v218 = vld [vmem:[%s198 + $0x40] sm:$0xff]
      %v219 = vld [vmem:[%s198 + $0x48] sm:$0xff]
      %v220 = vld [vmem:[%s198 + $0x50] sm:$0xff]
      %v221 = vld [vmem:[%s198 + $0x58] sm:$0xff]
      %v222 = vld [vmem:[%s198 + $0x60] sm:$0xff]
      %v223 = vld [vmem:[%s198 + $0x68] sm:$0xff]
      %v224 = vld [vmem:[%s198 + $0x70] sm:$0xff]
      %v225 = vld [vmem:[%s198 + $0x78] sm:$0xff]
      %v226 = vld [vmem:[%s198 + $0x80] sm:$0xff]
      %v227 = vld [vmem:[%s198 + $0x88] sm:$0xff]
      %v228 = vld [vmem:[%s198 + $0x90] sm:$0xff]
      %v229 = vld [vmem:[%s198 + $0x98] sm:$0xff]
      %v230 = vld [vmem:[%s198 + $0xa0] sm:$0xff]
      %v231 = vld [vmem:[%s198 + $0xa8] sm:$0xff]
      %v232 = vld [vmem:[%s198 + $0xb0] sm:$0xff]
      %v233 = vld [vmem:[%s198 + $0xb8] sm:$0xff]
      %v234 = vld [vmem:[%s198 + $0xc0] sm:$0xff]
      %v235 = vld [vmem:[%s198 + $0xc8] sm:$0xff]
      %v236 = vld [vmem:[%s198 + $0xd0] sm:$0xff]
      %v237 = vld [vmem:[%s198 + $0xd8] sm:$0xff]
      %v238 = vld [vmem:[%s198 + $0xe0] sm:$0xff]
      %v239 = vld [vmem:[%s198 + $0xe8] sm:$0xff]
      %v240 = vld [vmem:[%s198 + $0xf0] sm:$0xff]
      %v241 = vld [vmem:[%s198 + $0xf8] sm:$0xff]
      %v242 = vld [vmem:[%s1] sm:$0xff]
      %v243 = vld [vmem:[%s1 + $0x8] sm:$0xff]
      %v244 = vld [vmem:[%s1 + $0x10] sm:$0xff]
      %v245 = vld [vmem:[%s1 + $0x18] sm:$0xff]
      %v246 = vld [vmem:[%s1 + $0x20] sm:$0xff]
      %v247 = vld [vmem:[%s1 + $0x28] sm:$0xff]
      %v248 = vld [vmem:[%s1 + $0x30] sm:$0xff]
      %v249 = vld [vmem:[%s1 + $0x38] sm:$0xff]
      %v250 = vld [vmem:[%s1 + $0x40] sm:$0xff]
      %v251 = vld [vmem:[%s1 + $0x48] sm:$0xff]
      %v252 = vld [vmem:[%s1 + $0x50] sm:$0xff]
      %v253 = vld [vmem:[%s1 + $0x58] sm:$0xff]
      %v254 = vld [vmem:[%s1 + $0x60] sm:$0xff]
      %v255 = vld [vmem:[%s1 + $0x68] sm:$0xff]
      %v256 = vld [vmem:[%s1 + $0x70] sm:$0xff]
      %v257 = vld [vmem:[%s1 + $0x78] sm:$0xff]
      %v258 = vld [vmem:[%s2] sm:$0x1]
      %v260 = vlaneseq
      %v261 = vshrl.u32 %v260, 7
      %v262 = vsub.s32 0, %v261
      %v263 = vrot.slane %v258, %v262
      %265 = vmatprep.subr.mxu0 0.0
      %266 = vmatpush1.msra.mxu0 %v257
      %267 = vmatprep.subr.mxu0 0.0
      %268 = vmatpush1.msra.mxu0 %v256
      %269 = vmatprep.subr.mxu0 0.0
      %270 = vmatpush1.msra.mxu0 %v255
      %271 = vmatprep.subr.mxu0 0.0
      %272 = vmatpush1.msra.mxu0 %v254
      %273 = vmatprep.subr.mxu0 0.0
      %274 = vmatpush1.msra.mxu0 %v253
      %275 = vmatprep.subr.mxu0 0.0
      %276 = vmatpush1.msra.mxu0 %v252
      %277 = vmatprep.subr.mxu0 0.0
      %278 = vmatpush1.msra.mxu0 %v251
      %279 = vmatprep.subr.mxu0 0.0
      %280 = vmatpush1.msra.mxu0 %v250
      %281 = vmatprep.subr.mxu0 0.0
      %282 = vmatpush1.msra.mxu0 %v249
      %283 = vmatprep.subr.mxu0 0.0
      %284 = vmatpush1.msra.mxu0 %v248
      %285 = vmatprep.subr.mxu0 0.0
      %286 = vmatpush1.msra.mxu0 %v247
      %287 = vmatprep.subr.mxu0 0.0
      %288 = vmatpush1.msra.mxu0 %v246
      %289 = vmatprep.subr.mxu0 0.0
      %290 = vmatpush1.msra.mxu0 %v245
      %291 = vmatprep.subr.mxu0 0.0
      %292 = vmatpush1.msra.mxu0 %v244
      %293 = vmatprep.subr.mxu0 0.0
      %294 = vmatpush1.msra.mxu0 %v243
      %295 = vmatprep.subr.mxu0 0.0
      %296 = vmatpush1.msra.mxu0 %v242
      %297 = vmatprep.subr.mxu0 0.0
      %298 = vmatpush2.msra.mxu0 0.0
      %299 = vmatprep.subr.mxu0 0.0
      %300 = vmatpush2.msra.mxu0 0.0
      %301 = vmatprep.subr.mxu0 0.0
      %302 = vmatpush2.msra.mxu0 0.0
      %303 = vmatprep.subr.mxu0 0.0
      %304 = vmatpush2.msra.mxu0 0.0
      %305 = vmatprep.subr.mxu0 0.0
      %306 = vmatpush2.msra.mxu0 0.0
      %307 = vmatprep.subr.mxu0 0.0
      %308 = vmatpush2.msra.mxu0 0.0
      %309 = vmatprep.subr.mxu0 0.0
      %310 = vmatpush2.msra.mxu0 0.0
      %311 = vmatprep.subr.mxu0 0.0
      %312 = vmatpush2.msra.mxu0 0.0
      %313 = vmatprep.subr.mxu0 0.0
      %314 = vmatpush2.msra.mxu0 0.0
      %315 = vmatprep.subr.mxu0 0.0
      %316 = vmatpush2.msra.mxu0 0.0
      %317 = vmatprep.subr.mxu0 0.0
      %318 = vmatpush2.msra.mxu0 0.0
      %319 = vmatprep.subr.mxu0 0.0
      %320 = vmatpush2.msra.mxu0 0.0
      %321 = vmatprep.subr.mxu0 0.0
      %322 = vmatpush2.msra.mxu0 0.0
      %323 = vmatprep.subr.mxu0 0.0
      %324 = vmatpush2.msra.mxu0 0.0
      %325 = vmatprep.subr.mxu0 0.0
      %326 = vmatpush2.msra.mxu0 0.0
      %327 = vmatprep.subr.mxu0 0.0
      %328 = vmatpush2.msra.mxu0 0.0
      %329 = vmatprep.mubr.f32.mxu0 0.0
      %330 = vmatmul.mubr.f32.gmra.mxu0 %v210
      %v331 = vpop.f32.mrf.mxu0
      %v332 = vadd.f32 %v263, %v331
      %v333 = vpop.f32.mrf.mxu0
      %334 = vmatprep.mubr.f32.mxu0 0.0
      %335 = vmatmul.mubr.f32.gmra.mxu0 %v211
      %v336 = vpop.f32.mrf.mxu0
      %v337 = vadd.f32 %v263, %v336
      %v338 = vpop.f32.mrf.mxu0
      %339 = vmatprep.mubr.f32.mxu0 0.0
      %340 = vmatmul.mubr.f32.gmra.mxu0 %v212
      %v341 = vpop.f32.mrf.mxu0
      %v342 = vadd.f32 %v263, %v341
      %v343 = vpop.f32.mrf.mxu0
      %344 = vmatprep.mubr.f32.mxu0 0.0
      %345 = vmatmul.mubr.f32.gmra.mxu0 %v213
      %v346 = vpop.f32.mrf.mxu0
      %v347 = vadd.f32 %v263, %v346
      %v348 = vpop.f32.mrf.mxu0
      %349 = vmatprep.mubr.f32.mxu0 0.0
      %350 = vmatmul.mubr.f32.gmra.mxu0 %v214
      %v351 = vpop.f32.mrf.mxu0
      %v352 = vadd.f32 %v263, %v351
      %v353 = vpop.f32.mrf.mxu0
      %354 = vmatprep.mubr.f32.mxu0 0.0
      %355 = vmatmul.mubr.f32.gmra.mxu0 %v215
      %v356 = vpop.f32.mrf.mxu0
      %v357 = vadd.f32 %v263, %v356
      %v358 = vpop.f32.mrf.mxu0
      %359 = vmatprep.mubr.f32.mxu0 0.0
      %360 = vmatmul.mubr.f32.gmra.mxu0 %v216
      %v361 = vpop.f32.mrf.mxu0
      %v362 = vadd.f32 %v263, %v361
      %v363 = vpop.f32.mrf.mxu0
      %364 = vmatprep.mubr.f32.mxu0 0.0
      %365 = vmatmul.mubr.f32.gmra.mxu0 %v217
      %v366 = vpop.f32.mrf.mxu0
      %v367 = vadd.f32 %v263, %v366
      %v368 = vpop.f32.mrf.mxu0
      %369 = vmatprep.mubr.f32.mxu0 0.0
      %370 = vmatmul.mubr.f32.gmra.mxu0 %v218
      %v371 = vpop.f32.mrf.mxu0
      %v372 = vadd.f32 %v263, %v371
      %v373 = vpop.f32.mrf.mxu0
      %374 = vmatprep.mubr.f32.mxu0 0.0
      %375 = vmatmul.mubr.f32.gmra.mxu0 %v219
      %v376 = vpop.f32.mrf.mxu0
      %v377 = vadd.f32 %v263, %v376
      %v378 = vpop.f32.mrf.mxu0
      %379 = vmatprep.mubr.f32.mxu0 0.0
      %380 = vmatmul.mubr.f32.gmra.mxu0 %v220
      %v381 = vpop.f32.mrf.mxu0
      %v382 = vadd.f32 %v263, %v381
      %v383 = vpop.f32.mrf.mxu0
      %384 = vmatprep.mubr.f32.mxu0 0.0
      %385 = vmatmul.mubr.f32.gmra.mxu0 %v221
      %v386 = vpop.f32.mrf.mxu0
      %v387 = vadd.f32 %v263, %v386
      %v388 = vpop.f32.mrf.mxu0
      %389 = vmatprep.mubr.f32.mxu0 0.0
      %390 = vmatmul.mubr.f32.gmra.mxu0 %v222
      %v391 = vpop.f32.mrf.mxu0
      %v392 = vadd.f32 %v263, %v391
      %v393 = vpop.f32.mrf.mxu0
      %394 = vmatprep.mubr.f32.mxu0 0.0
      %395 = vmatmul.mubr.f32.gmra.mxu0 %v223
      %v396 = vpop.f32.mrf.mxu0
      %v397 = vadd.f32 %v263, %v396
      %v398 = vpop.f32.mrf.mxu0
      %399 = vmatprep.mubr.f32.mxu0 0.0
      %400 = vmatmul.mubr.f32.gmra.mxu0 %v224
      %v401 = vpop.f32.mrf.mxu0
      %v402 = vadd.f32 %v263, %v401
      %v403 = vpop.f32.mrf.mxu0
      %404 = vmatprep.mubr.f32.mxu0 0.0
      %405 = vmatmul.mubr.f32.gmra.mxu0 %v225
      %v406 = vpop.f32.mrf.mxu0
      %v407 = vadd.f32 %v263, %v406
      %v408 = vpop.f32.mrf.mxu0
      %409 = vmatprep.mubr.f32.mxu0 0.0
      %410 = vmatmul.mubr.f32.gmra.mxu0 %v226
      %v411 = vpop.f32.mrf.mxu0
      %v412 = vadd.f32 %v263, %v411
      %v413 = vpop.f32.mrf.mxu0
      %414 = vmatprep.mubr.f32.mxu0 0.0
      %415 = vmatmul.mubr.f32.gmra.mxu0 %v227
      %v416 = vpop.f32.mrf.mxu0
      %v417 = vadd.f32 %v263, %v416
      %v418 = vpop.f32.mrf.mxu0
      %419 = vmatprep.mubr.f32.mxu0 0.0
      %420 = vmatmul.mubr.f32.gmra.mxu0 %v228
      %v421 = vpop.f32.mrf.mxu0
      %v422 = vadd.f32 %v263, %v421
      %v423 = vpop.f32.mrf.mxu0
      %424 = vmatprep.mubr.f32.mxu0 0.0
      %425 = vmatmul.mubr.f32.gmra.mxu0 %v229
      %v426 = vpop.f32.mrf.mxu0
      %v427 = vadd.f32 %v263, %v426
      %v428 = vpop.f32.mrf.mxu0
      %429 = vmatprep.mubr.f32.mxu0 0.0
      %430 = vmatmul.mubr.f32.gmra.mxu0 %v230
      %v431 = vpop.f32.mrf.mxu0
      %v432 = vadd.f32 %v263, %v431
      %v433 = vpop.f32.mrf.mxu0
      %434 = vmatprep.mubr.f32.mxu0 0.0
      %435 = vmatmul.mubr.f32.gmra.mxu0 %v231
      %v436 = vpop.f32.mrf.mxu0
      %v437 = vadd.f32 %v263, %v436
      %v438 = vpop.f32.mrf.mxu0
      %439 = vmatprep.mubr.f32.mxu0 0.0
      %440 = vmatmul.mubr.f32.gmra.mxu0 %v232
      %v441 = vpop.f32.mrf.mxu0
      %v442 = vadd.f32 %v263, %v441
      %v443 = vpop.f32.mrf.mxu0
      %444 = vmatprep.mubr.f32.mxu0 0.0
      %445 = vmatmul.mubr.f32.gmra.mxu0 %v233
      %v446 = vpop.f32.mrf.mxu0
      %v447 = vadd.f32 %v263, %v446
      %v448 = vpop.f32.mrf.mxu0
      %449 = vmatprep.mubr.f32.mxu0 0.0
      %450 = vmatmul.mubr.f32.gmra.mxu0 %v234
      %v451 = vpop.f32.mrf.mxu0
      %v452 = vadd.f32 %v263, %v451
      %v453 = vpop.f32.mrf.mxu0
      %454 = vmatprep.mubr.f32.mxu0 0.0
      %455 = vmatmul.mubr.f32.gmra.mxu0 %v235
      %v456 = vpop.f32.mrf.mxu0
      %v457 = vadd.f32 %v263, %v456
      %v458 = vpop.f32.mrf.mxu0
      %459 = vmatprep.mubr.f32.mxu0 0.0
      %460 = vmatmul.mubr.f32.gmra.mxu0 %v236
      %v461 = vpop.f32.mrf.mxu0
      %v462 = vadd.f32 %v263, %v461
      %v463 = vpop.f32.mrf.mxu0
      %464 = vmatprep.mubr.f32.mxu0 0.0
      %465 = vmatmul.mubr.f32.gmra.mxu0 %v237
      %v466 = vpop.f32.mrf.mxu0
      %v467 = vadd.f32 %v263, %v466
      %v468 = vpop.f32.mrf.mxu0
      %469 = vmatprep.mubr.f32.mxu0 0.0
      %470 = vmatmul.mubr.f32.gmra.mxu0 %v238
      %v471 = vpop.f32.mrf.mxu0
      %v472 = vadd.f32 %v263, %v471
      %v473 = vpop.f32.mrf.mxu0
      %474 = vmatprep.mubr.f32.mxu0 0.0
      %475 = vmatmul.mubr.f32.gmra.mxu0 %v239
      %v476 = vpop.f32.mrf.mxu0
      %v477 = vadd.f32 %v263, %v476
      %v478 = vpop.f32.mrf.mxu0
      %479 = vmatprep.mubr.f32.mxu0 0.0
      %480 = vmatmul.mubr.f32.gmra.mxu0 %v240
      %v481 = vpop.f32.mrf.mxu0
      %v482 = vadd.f32 %v263, %v481
      %v483 = vpop.f32.mrf.mxu0
      %484 = vmatprep.mubr.f32.mxu0 0.0
      %485 = vmatmul.mubr.f32.gmra.mxu0 %v241
      %v486 = vpop.f32.mrf.mxu0
      %v487 = vadd.f32 %v263, %v486
      %v488 = vpop.f32.mrf.mxu0
      %489 = vdwg.mxu0
      %v490 = vmax.f32 %v332, 0.0
      %v491 = vmax.f32 %v337, 0.0
      %v492 = vmax.f32 %v342, 0.0
      %v493 = vmax.f32 %v347, 0.0
      %v494 = vmax.f32 %v352, 0.0
      %v495 = vmax.f32 %v357, 0.0
      %v496 = vmax.f32 %v362, 0.0
      %v497 = vmax.f32 %v367, 0.0
      %v498 = vmax.f32 %v372, 0.0
      %v499 = vmax.f32 %v377, 0.0
      %v500 = vmax.f32 %v382, 0.0
      %v501 = vmax.f32 %v387, 0.0
      %v502 = vmax.f32 %v392, 0.0
      %v503 = vmax.f32 %v397, 0.0
      %v504 = vmax.f32 %v402, 0.0
      %v505 = vmax.f32 %v407, 0.0
      %v506 = vmax.f32 %v412, 0.0
      %v507 = vmax.f32 %v417, 0.0
      %v508 = vmax.f32 %v422, 0.0
      %v509 = vmax.f32 %v427, 0.0
      %v510 = vmax.f32 %v432, 0.0
      %v511 = vmax.f32 %v437, 0.0
      %v512 = vmax.f32 %v442, 0.0
      %v513 = vmax.f32 %v447, 0.0
      %v514 = vmax.f32 %v452, 0.0
      %v515 = vmax.f32 %v457, 0.0
      %v516 = vmax.f32 %v462, 0.0
      %v517 = vmax.f32 %v467, 0.0
      %v518 = vmax.f32 %v472, 0.0
      %v519 = vmax.f32 %v477, 0.0
      %v520 = vmax.f32 %v482, 0.0
      %v521 = vmax.f32 %v487, 0.0
      %vm522 = vcmask 64512
      %523 = vst.msk [vmem:[%s208] sm:$0xff] %vm522, %v490
      %524 = vst.msk [vmem:[%s208 + $0x8] sm:$0xff] %vm522, %v491
      %525 = vst.msk [vmem:[%s208 + $0x10] sm:$0xff] %vm522, %v492
      %526 = vst.msk [vmem:[%s208 + $0x18] sm:$0xff] %vm522, %v493
      %527 = vst.msk [vmem:[%s208 + $0x20] sm:$0xff] %vm522, %v494
      %528 = vst.msk [vmem:[%s208 + $0x28] sm:$0xff] %vm522, %v495
      %529 = vst.msk [vmem:[%s208 + $0x30] sm:$0xff] %vm522, %v496
      %530 = vst.msk [vmem:[%s208 + $0x38] sm:$0xff] %vm522, %v497
      %531 = vst.msk [vmem:[%s208 + $0x40] sm:$0xff] %vm522, %v498
      %532 = vst.msk [vmem:[%s208 + $0x48] sm:$0xff] %vm522, %v499
      %533 = vst.msk [vmem:[%s208 + $0x50] sm:$0xff] %vm522, %v500
      %534 = vst.msk [vmem:[%s208 + $0x58] sm:$0xff] %vm522, %v501
      %535 = vst.msk [vmem:[%s208 + $0x60] sm:$0xff] %vm522, %v502
      %536 = vst.msk [vmem:[%s208 + $0x68] sm:$0xff] %vm522, %v503
      %537 = vst.msk [vmem:[%s208 + $0x70] sm:$0xff] %vm522, %v504
      %538 = vst.msk [vmem:[%s208 + $0x78] sm:$0xff] %vm522, %v505
      %539 = vst.msk [vmem:[%s208 + $0x80] sm:$0xff] %vm522, %v506
      %540 = vst.msk [vmem:[%s208 + $0x88] sm:$0xff] %vm522, %v507
      %541 = vst.msk [vmem:[%s208 + $0x90] sm:$0xff] %vm522, %v508
      %542 = vst.msk [vmem:[%s208 + $0x98] sm:$0xff] %vm522, %v509
      %543 = vst.msk [vmem:[%s208 + $0xa0] sm:$0xff] %vm522, %v510
      %544 = vst.msk [vmem:[%s208 + $0xa8] sm:$0xff] %vm522, %v511
      %545 = vst.msk [vmem:[%s208 + $0xb0] sm:$0xff] %vm522, %v512
      %546 = vst.msk [vmem:[%s208 + $0xb8] sm:$0xff] %vm522, %v513
      %547 = vst.msk [vmem:[%s208 + $0xc0] sm:$0xff] %vm522, %v514
      %548 = vst.msk [vmem:[%s208 + $0xc8] sm:$0xff] %vm522, %v515
      %549 = vst.msk [vmem:[%s208 + $0xd0] sm:$0xff] %vm522, %v516
      %550 = vst.msk [vmem:[%s208 + $0xd8] sm:$0xff] %vm522, %v517
      %551 = vst.msk [vmem:[%s208 + $0xe0] sm:$0xff] %vm522, %v518
      %552 = vst.msk [vmem:[%s208 + $0xe8] sm:$0xff] %vm522, %v519
      %553 = vst.msk [vmem:[%s208 + $0xf0] sm:$0xff] %vm522, %v520
      %554 = vst.msk [vmem:[%s208 + $0xf8] sm:$0xff] %vm522, %v521
      %s555 = smul.u32 32, %s18
      %p556 = scmp.lt.s32.totalorder %s19, 1
      %s557 = scalar_select %p556, %s19, 1
      %p558 = scmp.lt.s32.totalorder %s555, 31
      %s559 = scalar_select %p558, %s555, 31
      %s560 = smul.addr %s557, 32
      %s561 = sadd.s32 %s559, %s560
      %s562 = smul.addr %s561, 8
      %s563 = scalar_lea.vmem %s3, %s562
      // Predicated region
      $region33: #{conv_bn_relu.1} parent=31 // pred_check
        %p564 = pneg %p116
      $region34: #{conv_bn_relu.1} parent=31 // pred_check_branch
        %566 = sbr.rel (%p564) target = $region36
      $region35: #{conv_bn_relu.1} parent=31 // pred_region
        %s567 = smul.u32 32, %s18
      $region36: #{conv_bn_relu.1} parent=31 // pred_fallthru
        _
    $region32: #{conv_bn_relu.1} parent=5 // pred_fallthru
      _
    %p568 = scmp.le.s32.totalorder 2, %s9
    // Predicated region
    $region37: #{conv_bn_relu.1} parent=5 // pred_check
      %p569 = pneg %p568
    $region38: #{conv_bn_relu.1} parent=5 // pred_check_branch
      %571 = sbr.rel (%p569) target = $region40
    $region39: #{conv_bn_relu.1} parent=5 // pred_region
      %s572 = ssub.s32 %s9, 2
      // Predicated region
      $region41: #{conv_bn_relu.1} parent=39 // pred_check
        %p573 = pneg %p122
      $region42: #{conv_bn_relu.1} parent=39 // pred_check_branch
        %575 = sbr.rel (%p573) target = $region44
      $region43: #{conv_bn_relu.1} parent=39 // pred_region
        %s576 = smul.u32 32, %s20
        %p577 = scmp.lt.s32.totalorder %s21, 1
        %s578 = scalar_select %p577, %s21, 1
        %p579 = scmp.lt.s32.totalorder %s576, 31
        %s580 = scalar_select %p579, %s576, 31
        %s581 = smul.addr %s578, 32
        %s582 = sadd.s32 %s580, %s581
        %s583 = smul.addr %s582, 8
        %s584 = scalar_lea.vmem %s3, %s583
      $region44: #{conv_bn_relu.1} parent=39 // pred_fallthru
        _
    $region40: #{conv_bn_relu.1} parent=5 // pred_fallthru
      _
  $region6: #{conv_bn_relu.1} parent=0 // loop_footer
    %s13 = sadd.s32 1, %s9
  $region7: #{conv_bn_relu.1} parent=0 // loop_footer_branch
    %8 = sbr.rel target = $region3
  $region8: #{conv_bn_relu.1} parent=0 // loop_exit
    _

</llo_original>
